<compile_context>
chip_gen: v5e
topology: v5e:2x2
jax: 0.10.0
libtpu: 0.0.40
codegen_flags: <defaults>
</compile_context>

<pallas_src>
import jax
import jax.numpy as jnp
from jax import lax
from jax.experimental import pallas as pl
from jax.experimental.pallas import tpu as pltpu

EPS = 1e-5


def _resblock_kernel(x1_ref, w1_ref, b1_ref, g1_ref, be1_ref,
                     w2_ref, b2_ref, g2_ref, be2_ref, s_ref, out_ref):
    C, NL = out_ref.shape
    K = w2_ref.shape[0]
    pad = K // 2
    inv_n = 1.0 / NL

    def bn(y, g_ref, be_ref):
        # Single-pass batch stats: one sweep gives mean and E[y^2].
        m = jnp.sum(y, axis=1, keepdims=True) * inv_n
        ms = jnp.sum(y * y, axis=1, keepdims=True) * inv_n
        var = ms - m * m                                    # biased variance
        scale = lax.rsqrt(var + EPS) * g_ref[...]           # (C, 1)
        return (y - m) * scale + be_ref[...]

    # ---- conv1: one MXU matmul over the wrapper-packed im2col ---------------
    y1 = jnp.dot(w1_ref[...], x1_ref[...],
                 preferred_element_type=jnp.float32) + b1_ref[...]
    h = jnp.maximum(bn(y1, g1_ref, be1_ref), 0.0)           # BN1 + ReLU

    # ---- conv2: tap shifts as matmuls with precomputed shift matrices -------
    def tap(k, acc):
        slab = jnp.dot(h, s_ref[k], preferred_element_type=jnp.float32)
        return acc + jnp.dot(w2_ref[k], slab,
                             preferred_element_type=jnp.float32)

    y2 = lax.fori_loop(0, K, tap, jnp.zeros((C, NL), jnp.float32),
                       unroll=True) + b2_ref[...]
    h2 = bn(y2, g2_ref, be2_ref)                            # BN2 (no ReLU)

    # ---- residual add + final ReLU -------------------------------------------
    # Unpadded x (C, N*L) is exactly the k == pad block of the im2col input;
    # pad*C is a sublane offset, so this slice is cheap (no lane rotate).
    x = x1_ref[pl.ds(pad * C, C), :]
    out_ref[...] = jnp.maximum(x + h2, 0.0)


@jax.jit
def residual_block(x, w1, b1, g1, be1, w2, b2, g2, be2):
    """x: (N, C, L) float32; conv weights: (C_out, C_in, K) (PyTorch layout)."""
    N, C, L = x.shape
    K = w1.shape[-1]
    pad = K // 2
    NL = N * L
    f32 = jnp.float32

    # Wrapper-side im2col of x: X1[k*C+ci, n*L+l] = x[n, ci, l + k - pad].
    xpad = jnp.pad(x.astype(f32), ((0, 0), (0, 0), (pad, pad)))
    cols = [xpad[:, :, k:k + L] for k in range(K)]            # K x (N, C, L)
    x1 = jnp.stack(cols, 0).transpose(0, 2, 1, 3).reshape(K * C, NL)

    # Weight repack: conv1 as (C_out, K*C_in) (one matmul); conv2 per-tap.
    w1p = jnp.transpose(w1, (0, 2, 1)).reshape(C, K * C).astype(f32)
    w2k = jnp.transpose(w2, (2, 0, 1)).astype(f32)            # (K, C, C)

    # Per-tap shift matrices (batch-aware zero padding):
    #   S[k, p, q] = 1  iff  p == q + (k - pad)  and  0 <= (q % L) + (k-pad) < L
    q = jnp.arange(NL)
    lpos = q % L
    p = jnp.arange(NL)[:, None]
    smats = []
    for k in range(K):
        s = k - pad
        valid = (lpos + s >= 0) & (lpos + s < L)
        smats.append(((p == (q + s)[None, :]) & valid[None, :]).astype(f32))
    smat = jnp.stack(smats, 0)                                # (K, NL, NL)

    col = lambda v: v.reshape(C, 1).astype(f32)
    vmem = pl.BlockSpec(memory_space=pltpu.MemorySpace.VMEM)

    out_flat = pl.pallas_call(
        _resblock_kernel,
        out_shape=jax.ShapeDtypeStruct((C, NL), f32),
        in_specs=[vmem] * 10,
        out_specs=vmem,
    )(x1, w1p, col(b1), col(g1), col(be1),
      w2k, col(b2), col(g2), col(be2), smat)

    # Back to PyTorch's (N, C, L) layout.
    return out_flat.reshape(C, N, L).transpose(1, 0, 2)


def _ref_forward(x, w1, b1, g1, be1, w2, b2, g2, be2):
    """Pure-JAX reference of the PyTorch module forward (training-mode BN)."""
    def conv(x, w, b):
        y = lax.conv_general_dilated(
            x, w, window_strides=(1,), padding="SAME",
            dimension_numbers=("NCH", "OIH", "NCH"))
        return y + b[None, :, None]

    def bn(x, g, be):
        m = jnp.mean(x, axis=(0, 2), keepdims=True)
        v = jnp.mean((x - m) ** 2, axis=(0, 2), keepdims=True)
        return (x - m) * lax.rsqrt(v + EPS) * g[None, :, None] + be[None, :, None]

    h = jnp.maximum(bn(conv(x, w1, b1), g1, be1), 0.0)
    h = bn(conv(h, w2, b2), g2, be2)
    return jnp.maximum(x + h, 0.0)


if __name__ == "__main__":
    N, C, L, K = 2, 4, 16, 5   # batch, in_out_channels, seq length, kernel_size

    key = jax.random.PRNGKey(0)
    ks = jax.random.split(key, 9)
    x = jax.random.normal(ks[0], (N, C, L), jnp.float32)
    w1 = 0.2 * jax.random.normal(ks[1], (C, C, K), jnp.float32)
    b1 = 0.1 * jax.random.normal(ks[2], (C,), jnp.float32)
    g1 = 1.0 + 0.1 * jax.random.normal(ks[3], (C,), jnp.float32)
    be1 = 0.1 * jax.random.normal(ks[4], (C,), jnp.float32)
    w2 = 0.2 * jax.random.normal(ks[5], (C, C, K), jnp.float32)
    b2 = 0.1 * jax.random.normal(ks[6], (C,), jnp.float32)
    g2 = 1.0 + 0.1 * jax.random.normal(ks[7], (C,), jnp.float32)
    be2 = 0.1 * jax.random.normal(ks[8], (C,), jnp.float32)

    out = jax.block_until_ready(
        residual_block(x, w1, b1, g1, be1, w2, b2, g2, be2))

    ref = _ref_forward(x, w1, b1, g1, be1, w2, b2, g2, be2)
    assert out.shape == (N, C, L)
    err = jnp.max(jnp.abs(out - ref))
    assert jnp.allclose(out, ref, rtol=1e-3, atol=1e-3), f"max abs err = {err}"

    print("KERNEL_OK")
</pallas_src>

<mosaic_0001>
module attributes {stable_mosaic.version = 11 : i64} {
  func.func @_resblock_kernel(%arg0: memref<20x32xf32, #tpu.memory_space<vmem>>, %arg1: memref<4x20xf32, #tpu.memory_space<vmem>>, %arg2: memref<4x1xf32, #tpu.memory_space<vmem>>, %arg3: memref<4x1xf32, #tpu.memory_space<vmem>>, %arg4: memref<4x1xf32, #tpu.memory_space<vmem>>, %arg5: memref<5x4x4xf32, #tpu.memory_space<vmem>>, %arg6: memref<4x1xf32, #tpu.memory_space<vmem>>, %arg7: memref<4x1xf32, #tpu.memory_space<vmem>>, %arg8: memref<4x1xf32, #tpu.memory_space<vmem>>, %arg9: memref<5x32x32xf32, #tpu.memory_space<vmem>>, %arg10: memref<4x32xf32, #tpu.memory_space<vmem>>) attributes {dimension_semantics = [], scalar_prefetch = 0 : i64, scratch_operands = 0 : i64, tpu.core_type = #tpu.core_type<tc>} {
    %c0 = arith.constant 0 : index
    %c0_0 = arith.constant 0 : index
    %0 = vector.load %arg1[%c0, %c0_0] : memref<4x20xf32, #tpu.memory_space<vmem>>, vector<4x20xf32>
    %c0_1 = arith.constant 0 : index
    %c0_2 = arith.constant 0 : index
    %1 = vector.load %arg0[%c0_1, %c0_2] : memref<20x32xf32, #tpu.memory_space<vmem>>, vector<20x32xf32>
    %cst = arith.constant dense<0.000000e+00> : vector<4x32xf32>
    %2 = tpu.matmul %0, %1, %cst {dimension_numbers = #tpu.dot_dimension_numbers<[1], [0], [0], [1], [0, 0, 1, 1], [], []>} : vector<4x20xf32>, vector<20x32xf32>, vector<4x32xf32> -> vector<4x32xf32>
    %c0_3 = arith.constant 0 : index
    %c0_4 = arith.constant 0 : index
    %3 = vector.load %arg2[%c0_3, %c0_4] : memref<4x1xf32, #tpu.memory_space<vmem>>, vector<4x1xf32>
    %4 = vector.broadcast %3 : vector<4x1xf32> to vector<4x32xf32>
    %5 = arith.addf %2, %4 : vector<4x32xf32>
    %cst_5 = arith.constant dense<0.000000e+00> : vector<4xf32>
    %6 = vector.multi_reduction <add>, %5, %cst_5 [1] : vector<4x32xf32> to vector<4xf32>
    %7 = vector.shape_cast %6 : vector<4xf32> to vector<4x1xf32>
    %cst_6 = arith.constant 3.125000e-02 : f32
    %8 = vector.broadcast %cst_6 : f32 to vector<4x1xf32>
    %9 = arith.mulf %7, %8 : vector<4x1xf32>
    %10 = arith.mulf %5, %5 : vector<4x32xf32>
    %cst_7 = arith.constant dense<0.000000e+00> : vector<4xf32>
    %11 = vector.multi_reduction <add>, %10, %cst_7 [1] : vector<4x32xf32> to vector<4xf32>
    %12 = vector.shape_cast %11 : vector<4xf32> to vector<4x1xf32>
    %cst_8 = arith.constant 3.125000e-02 : f32
    %13 = vector.broadcast %cst_8 : f32 to vector<4x1xf32>
    %14 = arith.mulf %12, %13 : vector<4x1xf32>
    %15 = arith.mulf %9, %9 : vector<4x1xf32>
    %16 = arith.subf %14, %15 : vector<4x1xf32>
    %cst_9 = arith.constant 9.99999974E-6 : f32
    %17 = vector.broadcast %cst_9 : f32 to vector<4x1xf32>
    %18 = arith.addf %16, %17 : vector<4x1xf32>
    %19 = math.rsqrt %18 : vector<4x1xf32>
    %c0_10 = arith.constant 0 : index
    %c0_11 = arith.constant 0 : index
    %20 = vector.load %arg3[%c0_10, %c0_11] : memref<4x1xf32, #tpu.memory_space<vmem>>, vector<4x1xf32>
    %21 = arith.mulf %19, %20 : vector<4x1xf32>
    %22 = vector.broadcast %9 : vector<4x1xf32> to vector<4x32xf32>
    %23 = arith.subf %5, %22 : vector<4x32xf32>
    %24 = vector.broadcast %21 : vector<4x1xf32> to vector<4x32xf32>
    %25 = arith.mulf %23, %24 : vector<4x32xf32>
    %c0_12 = arith.constant 0 : index
    %c0_13 = arith.constant 0 : index
    %26 = vector.load %arg4[%c0_12, %c0_13] : memref<4x1xf32, #tpu.memory_space<vmem>>, vector<4x1xf32>
    %27 = vector.broadcast %26 : vector<4x1xf32> to vector<4x32xf32>
    %28 = arith.addf %25, %27 : vector<4x32xf32>
    %cst_14 = arith.constant 0.000000e+00 : f32
    %29 = vector.broadcast %cst_14 : f32 to vector<4x32xf32>
    %30 = arith.maximumf %28, %29 : vector<4x32xf32>
    %cst_15 = arith.constant 0.000000e+00 : f32
    %31 = vector.broadcast %cst_15 : f32 to vector<4x32xf32>
    %c0_i32 = arith.constant 0 : i32
    %32 = arith.index_cast %c0_i32 : i32 to index
    %c0_16 = arith.constant 0 : index
    %c0_17 = arith.constant 0 : index
    %33 = vector.load %arg9[%32, %c0_16, %c0_17] : memref<5x32x32xf32, #tpu.memory_space<vmem>>, vector<1x32x32xf32>
    %34 = vector.shape_cast %33 : vector<1x32x32xf32> to vector<32x32xf32>
    %cst_18 = arith.constant dense<0.000000e+00> : vector<4x32xf32>
    %35 = tpu.matmul %30, %34, %cst_18 {dimension_numbers = #tpu.dot_dimension_numbers<[1], [0], [0], [1], [0, 0, 1, 1], [], []>} : vector<4x32xf32>, vector<32x32xf32>, vector<4x32xf32> -> vector<4x32xf32>
    %36 = arith.index_cast %c0_i32 : i32 to index
    %c0_19 = arith.constant 0 : index
    %c0_20 = arith.constant 0 : index
    %37 = vector.load %arg5[%36, %c0_19, %c0_20] : memref<5x4x4xf32, #tpu.memory_space<vmem>>, vector<1x4x4xf32>
    %38 = vector.shape_cast %37 : vector<1x4x4xf32> to vector<4x4xf32>
    %cst_21 = arith.constant dense<0.000000e+00> : vector<4x32xf32>
    %39 = tpu.matmul %38, %35, %cst_21 {dimension_numbers = #tpu.dot_dimension_numbers<[1], [0], [0], [1], [0, 0, 1, 1], [], []>} : vector<4x4xf32>, vector<4x32xf32>, vector<4x32xf32> -> vector<4x32xf32>
    %40 = arith.addf %31, %39 : vector<4x32xf32>
    %c1_i32 = arith.constant 1 : i32
    %41 = arith.index_cast %c1_i32 : i32 to index
    %c0_22 = arith.constant 0 : index
    %c0_23 = arith.constant 0 : index
    %42 = vector.load %arg9[%41, %c0_22, %c0_23] : memref<5x32x32xf32, #tpu.memory_space<vmem>>, vector<1x32x32xf32>
    %43 = vector.shape_cast %42 : vector<1x32x32xf32> to vector<32x32xf32>
    %cst_24 = arith.constant dense<0.000000e+00> : vector<4x32xf32>
    %44 = tpu.matmul %30, %43, %cst_24 {dimension_numbers = #tpu.dot_dimension_numbers<[1], [0], [0], [1], [0, 0, 1, 1], [], []>} : vector<4x32xf32>, vector<32x32xf32>, vector<4x32xf32> -> vector<4x32xf32>
    %45 = arith.index_cast %c1_i32 : i32 to index
    %c0_25 = arith.constant 0 : index
    %c0_26 = arith.constant 0 : index
    %46 = vector.load %arg5[%45, %c0_25, %c0_26] : memref<5x4x4xf32, #tpu.memory_space<vmem>>, vector<1x4x4xf32>
    %47 = vector.shape_cast %46 : vector<1x4x4xf32> to vector<4x4xf32>
    %cst_27 = arith.constant dense<0.000000e+00> : vector<4x32xf32>
    %48 = tpu.matmul %47, %44, %cst_27 {dimension_numbers = #tpu.dot_dimension_numbers<[1], [0], [0], [1], [0, 0, 1, 1], [], []>} : vector<4x4xf32>, vector<4x32xf32>, vector<4x32xf32> -> vector<4x32xf32>
    %49 = arith.addf %40, %48 : vector<4x32xf32>
    %c2_i32 = arith.constant 2 : i32
    %50 = arith.index_cast %c2_i32 : i32 to index
    %c0_28 = arith.constant 0 : index
    %c0_29 = arith.constant 0 : index
    %51 = vector.load %arg9[%50, %c0_28, %c0_29] : memref<5x32x32xf32, #tpu.memory_space<vmem>>, vector<1x32x32xf32>
    %52 = vector.shape_cast %51 : vector<1x32x32xf32> to vector<32x32xf32>
    %cst_30 = arith.constant dense<0.000000e+00> : vector<4x32xf32>
    %53 = tpu.matmul %30, %52, %cst_30 {dimension_numbers = #tpu.dot_dimension_numbers<[1], [0], [0], [1], [0, 0, 1, 1], [], []>} : vector<4x32xf32>, vector<32x32xf32>, vector<4x32xf32> -> vector<4x32xf32>
    %54 = arith.index_cast %c2_i32 : i32 to index
    %c0_31 = arith.constant 0 : index
    %c0_32 = arith.constant 0 : index
    %55 = vector.load %arg5[%54, %c0_31, %c0_32] : memref<5x4x4xf32, #tpu.memory_space<vmem>>, vector<1x4x4xf32>
    %56 = vector.shape_cast %55 : vector<1x4x4xf32> to vector<4x4xf32>
    %cst_33 = arith.constant dense<0.000000e+00> : vector<4x32xf32>
    %57 = tpu.matmul %56, %53, %cst_33 {dimension_numbers = #tpu.dot_dimension_numbers<[1], [0], [0], [1], [0, 0, 1, 1], [], []>} : vector<4x4xf32>, vector<4x32xf32>, vector<4x32xf32> -> vector<4x32xf32>
    %58 = arith.addf %49, %57 : vector<4x32xf32>
    %c3_i32 = arith.constant 3 : i32
    %59 = arith.index_cast %c3_i32 : i32 to index
    %c0_34 = arith.constant 0 : index
    %c0_35 = arith.constant 0 : index
    %60 = vector.load %arg9[%59, %c0_34, %c0_35] : memref<5x32x32xf32, #tpu.memory_space<vmem>>, vector<1x32x32xf32>
    %61 = vector.shape_cast %60 : vector<1x32x32xf32> to vector<32x32xf32>
    %cst_36 = arith.constant dense<0.000000e+00> : vector<4x32xf32>
    %62 = tpu.matmul %30, %61, %cst_36 {dimension_numbers = #tpu.dot_dimension_numbers<[1], [0], [0], [1], [0, 0, 1, 1], [], []>} : vector<4x32xf32>, vector<32x32xf32>, vector<4x32xf32> -> vector<4x32xf32>
    %63 = arith.index_cast %c3_i32 : i32 to index
    %c0_37 = arith.constant 0 : index
    %c0_38 = arith.constant 0 : index
    %64 = vector.load %arg5[%63, %c0_37, %c0_38] : memref<5x4x4xf32, #tpu.memory_space<vmem>>, vector<1x4x4xf32>
    %65 = vector.shape_cast %64 : vector<1x4x4xf32> to vector<4x4xf32>
    %cst_39 = arith.constant dense<0.000000e+00> : vector<4x32xf32>
    %66 = tpu.matmul %65, %62, %cst_39 {dimension_numbers = #tpu.dot_dimension_numbers<[1], [0], [0], [1], [0, 0, 1, 1], [], []>} : vector<4x4xf32>, vector<4x32xf32>, vector<4x32xf32> -> vector<4x32xf32>
    %67 = arith.addf %58, %66 : vector<4x32xf32>
    %c4_i32 = arith.constant 4 : i32
    %68 = arith.index_cast %c4_i32 : i32 to index
    %c0_40 = arith.constant 0 : index
    %c0_41 = arith.constant 0 : index
    %69 = vector.load %arg9[%68, %c0_40, %c0_41] : memref<5x32x32xf32, #tpu.memory_space<vmem>>, vector<1x32x32xf32>
    %70 = vector.shape_cast %69 : vector<1x32x32xf32> to vector<32x32xf32>
    %cst_42 = arith.constant dense<0.000000e+00> : vector<4x32xf32>
    %71 = tpu.matmul %30, %70, %cst_42 {dimension_numbers = #tpu.dot_dimension_numbers<[1], [0], [0], [1], [0, 0, 1, 1], [], []>} : vector<4x32xf32>, vector<32x32xf32>, vector<4x32xf32> -> vector<4x32xf32>
    %72 = arith.index_cast %c4_i32 : i32 to index
    %c0_43 = arith.constant 0 : index
    %c0_44 = arith.constant 0 : index
    %73 = vector.load %arg5[%72, %c0_43, %c0_44] : memref<5x4x4xf32, #tpu.memory_space<vmem>>, vector<1x4x4xf32>
    %74 = vector.shape_cast %73 : vector<1x4x4xf32> to vector<4x4xf32>
    %cst_45 = arith.constant dense<0.000000e+00> : vector<4x32xf32>
    %75 = tpu.matmul %74, %71, %cst_45 {dimension_numbers = #tpu.dot_dimension_numbers<[1], [0], [0], [1], [0, 0, 1, 1], [], []>} : vector<4x4xf32>, vector<4x32xf32>, vector<4x32xf32> -> vector<4x32xf32>
    %76 = arith.addf %67, %75 : vector<4x32xf32>
    %c5_i32 = arith.constant 5 : i32
    %c0_46 = arith.constant 0 : index
    %c0_47 = arith.constant 0 : index
    %77 = vector.load %arg6[%c0_46, %c0_47] : memref<4x1xf32, #tpu.memory_space<vmem>>, vector<4x1xf32>
    %78 = vector.broadcast %77 : vector<4x1xf32> to vector<4x32xf32>
    %79 = arith.addf %76, %78 : vector<4x32xf32>
    %cst_48 = arith.constant dense<0.000000e+00> : vector<4xf32>
    %80 = vector.multi_reduction <add>, %79, %cst_48 [1] : vector<4x32xf32> to vector<4xf32>
    %81 = vector.shape_cast %80 : vector<4xf32> to vector<4x1xf32>
    %cst_49 = arith.constant 3.125000e-02 : f32
    %82 = vector.broadcast %cst_49 : f32 to vector<4x1xf32>
    %83 = arith.mulf %81, %82 : vector<4x1xf32>
    %84 = arith.mulf %79, %79 : vector<4x32xf32>
    %cst_50 = arith.constant dense<0.000000e+00> : vector<4xf32>
    %85 = vector.multi_reduction <add>, %84, %cst_50 [1] : vector<4x32xf32> to vector<4xf32>
    %86 = vector.shape_cast %85 : vector<4xf32> to vector<4x1xf32>
    %cst_51 = arith.constant 3.125000e-02 : f32
    %87 = vector.broadcast %cst_51 : f32 to vector<4x1xf32>
    %88 = arith.mulf %86, %87 : vector<4x1xf32>
    %89 = arith.mulf %83, %83 : vector<4x1xf32>
    %90 = arith.subf %88, %89 : vector<4x1xf32>
    %cst_52 = arith.constant 9.99999974E-6 : f32
    %91 = vector.broadcast %cst_52 : f32 to vector<4x1xf32>
    %92 = arith.addf %90, %91 : vector<4x1xf32>
    %93 = math.rsqrt %92 : vector<4x1xf32>
    %c0_53 = arith.constant 0 : index
    %c0_54 = arith.constant 0 : index
    %94 = vector.load %arg7[%c0_53, %c0_54] : memref<4x1xf32, #tpu.memory_space<vmem>>, vector<4x1xf32>
    %95 = arith.mulf %93, %94 : vector<4x1xf32>
    %96 = vector.broadcast %83 : vector<4x1xf32> to vector<4x32xf32>
    %97 = arith.subf %79, %96 : vector<4x32xf32>
    %98 = vector.broadcast %95 : vector<4x1xf32> to vector<4x32xf32>
    %99 = arith.mulf %97, %98 : vector<4x32xf32>
    %c0_55 = arith.constant 0 : index
    %c0_56 = arith.constant 0 : index
    %100 = vector.load %arg8[%c0_55, %c0_56] : memref<4x1xf32, #tpu.memory_space<vmem>>, vector<4x1xf32>
    %101 = vector.broadcast %100 : vector<4x1xf32> to vector<4x32xf32>
    %102 = arith.addf %99, %101 : vector<4x32xf32>
    %c8 = arith.constant 8 : index
    %c0_57 = arith.constant 0 : index
    %103 = vector.load %arg0[%c8, %c0_57] : memref<20x32xf32, #tpu.memory_space<vmem>>, vector<4x32xf32>
    %104 = arith.addf %103, %102 : vector<4x32xf32>
    %cst_58 = arith.constant 0.000000e+00 : f32
    %105 = vector.broadcast %cst_58 : f32 to vector<4x32xf32>
    %106 = arith.maximumf %104, %105 : vector<4x32xf32>
    %c0_59 = arith.constant 0 : index
    %c0_60 = arith.constant 0 : index
    %107 = vector.load %arg10[%c0_59, %c0_60] : memref<4x32xf32, #tpu.memory_space<vmem>>, vector<4x32xf32>
    tpu.vector_store %arg10[%c0_59, %c0_60], %106 {strides = array<i32>} : memref<4x32xf32, #tpu.memory_space<vmem>>, vector<4x32xf32>,
    return
  }
}

</mosaic_0001>

<llo_original>
// kernel: residual_block.1
$region0: #{residual_block.1}
  #allocation0 [shape = 'u32[]', space=smem, size = 0x4, offset = 0x4, fixed_abs, tag = 'smem constant byte address 0x4 - core index']
  #allocation1 [shape = 'u32[72,128]{1,0:T(1,128)}', space=vmem, size = 0x9000, scoped, tag = 'internal scratch']
  %s0 = inlined_call_operand.vmem [shape: f32[20,32], index: 0, kind: input, shape index: {}]
  %s1 = inlined_call_operand.vmem [shape: f32[4,20], index: 1, kind: input, shape index: {}]
  %s2 = inlined_call_operand.vmem [shape: f32[4,1], index: 2, kind: input, shape index: {}]
  %s3 = inlined_call_operand.vmem [shape: f32[4,1], index: 3, kind: input, shape index: {}]
  %s4 = inlined_call_operand.vmem [shape: f32[4,1], index: 4, kind: input, shape index: {}]
  %s5 = inlined_call_operand.vmem [shape: f32[5,4,4], index: 5, kind: input, shape index: {}]
  %s6 = inlined_call_operand.vmem [shape: f32[4,1], index: 6, kind: input, shape index: {}]
  %s7 = inlined_call_operand.vmem [shape: f32[4,1], index: 7, kind: input, shape index: {}]
  %s8 = inlined_call_operand.vmem [shape: f32[4,1], index: 8, kind: input, shape index: {}]
  %s9 = inlined_call_operand.vmem [shape: f32[5,32,32], index: 9, kind: input, shape index: {}]
  %s10 = inlined_call_operand.vmem [shape: f32[4,32], index: 10, kind: output, shape index: {}]
  %s11 = sld [smem:[#allocation0]]
  $region50: #{residual_block.1} parent=0
    _
  %s13 = ssub.s32 1, %s11
  %s14 = scalar_select 0, %s13, %s11
  // Predicated region
  $region2: #{residual_block.1} parent=0 // pred_check
    _
  $region3: #{residual_block.1} parent=0 // pred_check_branch
    %16 = sbr.rel (0) target = $region5
  $region4: #{residual_block.1} parent=0 // pred_region
    _
  $region5: #{residual_block.1} parent=0 // pred_fallthru
    _
  // Predicated region
  $region6: #{residual_block.1} parent=0 // pred_check
    _
  $region7: #{residual_block.1} parent=0 // pred_check_branch
    %18 = sbr.rel (0) target = $region9
  $region8: #{residual_block.1} parent=0 // pred_region
    _
  $region9: #{residual_block.1} parent=0 // pred_fallthru
    _
  // Predicated region
  $region10: #{residual_block.1} parent=0 // pred_check
    _
  $region11: #{residual_block.1} parent=0 // pred_check_branch
    %20 = sbr.rel (0) target = $region13
  $region12: #{residual_block.1} parent=0 // pred_region
    _
  $region13: #{residual_block.1} parent=0 // pred_fallthru
    _
  // Predicated region
  $region14: #{residual_block.1} parent=0 // pred_check
    _
  $region15: #{residual_block.1} parent=0 // pred_check_branch
    %22 = sbr.rel (0) target = $region17
  $region16: #{residual_block.1} parent=0 // pred_region
    _
  $region17: #{residual_block.1} parent=0 // pred_fallthru
    _
  // Predicated region
  $region18: #{residual_block.1} parent=0 // pred_check
    _
  $region19: #{residual_block.1} parent=0 // pred_check_branch
    %24 = sbr.rel (0) target = $region21
  $region20: #{residual_block.1} parent=0 // pred_region
    _
  $region21: #{residual_block.1} parent=0 // pred_fallthru
    _
  // Predicated region
  $region22: #{residual_block.1} parent=0 // pred_check
    _
  $region23: #{residual_block.1} parent=0 // pred_check_branch
    %26 = sbr.rel (0) target = $region25
  $region24: #{residual_block.1} parent=0 // pred_region
    _
  $region25: #{residual_block.1} parent=0 // pred_fallthru
    _
  // Predicated region
  $region26: #{residual_block.1} parent=0 // pred_check
    _
  $region27: #{residual_block.1} parent=0 // pred_check_branch
    %28 = sbr.rel (0) target = $region29
  $region28: #{residual_block.1} parent=0 // pred_region
    _
  $region29: #{residual_block.1} parent=0 // pred_fallthru
    _
  // Predicated region
  $region30: #{residual_block.1} parent=0 // pred_check
    _
  $region31: #{residual_block.1} parent=0 // pred_check_branch
    %30 = sbr.rel (0) target = $region33
  $region32: #{residual_block.1} parent=0 // pred_region
    _
  $region33: #{residual_block.1} parent=0 // pred_fallthru
    _
  // Predicated region
  $region34: #{residual_block.1} parent=0 // pred_check
    _
  $region35: #{residual_block.1} parent=0 // pred_check_branch
    %32 = sbr.rel (0) target = $region37
  $region36: #{residual_block.1} parent=0 // pred_region
    _
  $region37: #{residual_block.1} parent=0 // pred_fallthru
    _
  // Predicated region
  $region38: #{residual_block.1} parent=0 // pred_check
    _
  $region39: #{residual_block.1} parent=0 // pred_check_branch
    %34 = sbr.rel (0) target = $region41
  $region40: #{residual_block.1} parent=0 // pred_region
    _
  $region41: #{residual_block.1} parent=0 // pred_fallthru
    _
  %v35 = vld [vmem:[%s1] sm:$0xf]
  %v36 = vld [vmem:[%s0] sm:$0xff]
  %v37 = vld [vmem:[%s0 + $0x8] sm:$0xff]
  %v38 = vld [vmem:[%s0 + $0x10] sm:$0xf]
  %v39 = vld [vmem:[%s2] sm:$0xf]
  %41 = vset.pattern.permute.xlu0 0
  %42 = vperm.xlu0 %41, %v39
  %v43 = vpop.permute.xlu0 %42
  %vm45 = vcmask 162816
  %v47 = vsel %vm45, %v35, 0
  %vm49 = vcmask 1043456
  %v51 = vsel %vm49, %v38, 0
  %53 = vmatpush.msra.mxu0 0.0
  %54 = vmatpush.msra.mxu0 0.0
  %55 = vmatpush.msra.mxu0 0.0
  %56 = vmatpush.msra.mxu0 0.0
  %57 = vmatpush.msra.mxu0 0.0
  %58 = vmatpush.msra.mxu0 0.0
  %59 = vmatpush.msra.mxu0 0.0
  %60 = vmatpush.msra.mxu0 0.0
  %61 = vmatpush.msra.mxu0 0.0
  %62 = vmatpush.msra.mxu0 0.0
  %63 = vmatpush.msra.mxu0 0.0
  %64 = vmatpush.msra.mxu0 0.0
  %65 = vmatpush.msra.mxu0 0.0
  %66 = vmatpush.msra.mxu0 %v51
  %67 = vmatpush.msra.mxu0 %v37
  %68 = vmatpush.msra.mxu0 %v36
  %69 = vmatmul.f32.gmra.mxu0 %v47
  %v70 = vpop.f32.mrf.mxu0
  %v71 = vadd.f32 %v43, %v70
  %72 = vdwg.mxu0
  %vm73 = vcmask 257024
  %v74 = vsel %vm73, %v71, 0.0
  %75 = vadd.xlane.f32.xlu0 %v74
  %v76 = vpop.xlane.xlu0 %75
  %v77 = vmul.f32 %v76, 0.03125
  %v78 = vmul.f32 %v71, %v71
  %v79 = vsel %vm73, %v78, 0.0
  %80 = vadd.xlane.f32.xlu0 %v79
  %v81 = vpop.xlane.xlu0 %80
  %v82 = vmul.f32 %v81, 0.03125
  %v83 = vmul.f32 %v77, %v77
  %v84 = vsub.f32 %v82, %v83
  %v85 = vadd.f32 %v84, 1e-05
  %v86 = vrsqrt.pop %v85
  %v87 = vmul.f32 %v86, %v85
  %v88 = vmul.f32 %v87, %v86
  %v89 = vmul.f32 0.5, %v88
  %v90 = vsub.f32 1.5, %v89
  %v91 = vmul.f32 %v86, %v90
  %vm92 = vweird.f32 %v85
  %vm93 = vweird.f32 %v86
  %vm94 = vmor %vm92, %vm93
  %v95 = vsel %vm94, %v86, %v91
  %v96 = vld [vmem:[%s3] sm:$0xf]
  %v97 = vmul.f32 %v95, %v96
  %v98 = vsub.f32 %v71, %v77
  %100 = vset.pattern.permute.xlu0 0
  %101 = vperm.xlu0 %100, %v97
  %v102 = vpop.permute.xlu0 %101
  %v104 = vmul.f32 %v98, %v102
  %v105 = vld [vmem:[%s4] sm:$0xf]
  %107 = vset.pattern.permute.xlu0 0
  %108 = vperm.xlu0 %107, %v105
  %v109 = vpop.permute.xlu0 %108
  %v111 = vadd.f32 %v104, %v109
  %v112 = vmax.f32 %v111, 0.0
  %v113 = vld [vmem:[%s9] sm:$0xff]
  %v114 = vld [vmem:[%s9 + $0x8] sm:$0xff]
  %v115 = vld [vmem:[%s9 + $0x10] sm:$0xff]
  %v116 = vld [vmem:[%s9 + $0x18] sm:$0xff]
  %vm117 = vcmask 261120
  %v119 = vsel %vm117, %v112, 0
  %121 = vmatpush.msra.mxu0 0.0
  %122 = vmatpush.msra.mxu0 0.0
  %123 = vmatpush.msra.mxu0 0.0
  %124 = vmatpush.msra.mxu0 0.0
  %125 = vmatpush.msra.mxu0 0.0
  %126 = vmatpush.msra.mxu0 0.0
  %127 = vmatpush.msra.mxu0 0.0
  %128 = vmatpush.msra.mxu0 0.0
  %129 = vmatpush.msra.mxu0 0.0
  %130 = vmatpush.msra.mxu0 0.0
  %131 = vmatpush.msra.mxu0 0.0
  %132 = vmatpush.msra.mxu0 0.0
  %133 = vmatpush.msra.mxu0 %v116
  %134 = vmatpush.msra.mxu0 %v115
  %135 = vmatpush.msra.mxu0 %v114
  %136 = vmatpush.msra.mxu0 %v113
  %137 = vmatmul.f32.gmra.mxu0 %v119
  %v138 = vpop.f32.mrf.mxu0
  %v139 = vadd.f32 0.0, %v138
  %140 = vdwg.mxu0
  %v141 = vld [vmem:[%s5] sm:$0xf]
  %s142 = scalar_lea.vmem %s9, 32
  %v143 = vld [vmem:[%s142] sm:$0xff]
  %v144 = vld [vmem:[%s142 + $0x8] sm:$0xff]
  %v145 = vld [vmem:[%s142 + $0x10] sm:$0xff]
  %v146 = vld [vmem:[%s142 + $0x18] sm:$0xff]
  %147 = vmatpush.msra.mxu0 0.0
  %148 = vmatpush.msra.mxu0 0.0
  %149 = vmatpush.msra.mxu0 0.0
  %150 = vmatpush.msra.mxu0 0.0
  %151 = vmatpush.msra.mxu0 0.0
  %152 = vmatpush.msra.mxu0 0.0
  %153 = vmatpush.msra.mxu0 0.0
  %154 = vmatpush.msra.mxu0 0.0
  %155 = vmatpush.msra.mxu0 0.0
  %156 = vmatpush.msra.mxu0 0.0
  %157 = vmatpush.msra.mxu0 0.0
  %158 = vmatpush.msra.mxu0 0.0
  %159 = vmatpush.msra.mxu0 %v146
  %160 = vmatpush.msra.mxu0 %v145
  %161 = vmatpush.msra.mxu0 %v144
  %162 = vmatpush.msra.mxu0 %v143
  %163 = vmatmul.f32.gmra.mxu0 %v119
  %v164 = vpop.f32.mrf.mxu0
  %v165 = vadd.f32 0.0, %v164
  %166 = vdwg.mxu0
  %s167 = scalar_lea.vmem %s5, 4
  %v168 = vld [vmem:[%s167] sm:$0xf]
  %vm169 = vcmask 31744
  %v171 = vsel %vm169, %v168, 0
  %v174 = vsel %vm49, %v165, 0
  %176 = vmatpush.msra.mxu0 0.0
  %177 = vmatpush.msra.mxu0 0.0
  %178 = vmatpush.msra.mxu0 0.0
  %179 = vmatpush.msra.mxu0 0.0
  %180 = vmatpush.msra.mxu0 0.0
  %181 = vmatpush.msra.mxu0 0.0
  %182 = vmatpush.msra.mxu0 0.0
  %183 = vmatpush.msra.mxu0 0.0
  %184 = vmatpush.msra.mxu0 0.0
  %185 = vmatpush.msra.mxu0 0.0
  %186 = vmatpush.msra.mxu0 0.0
  %187 = vmatpush.msra.mxu0 0.0
  %188 = vmatpush.msra.mxu0 0.0
  %189 = vmatpush.msra.mxu0 0.0
  %190 = vmatpush.msra.mxu0 0.0
  %191 = vmatpush.msra.mxu0 %v174
  %192 = vmatmul.f32.gmra.mxu0 %v171
  %v193 = vpop.f32.mrf.mxu0
  %v194 = vadd.f32 0.0, %v193
  %195 = vdwg.mxu0
  %v197 = vsel %vm169, %v141, 0
  %v200 = vsel %vm49, %v139, 0
  %202 = vmatpush.msra.mxu0 0.0
  %203 = vmatpush.msra.mxu0 0.0
  %204 = vmatpush.msra.mxu0 0.0
  %205 = vmatpush.msra.mxu0 0.0
  %206 = vmatpush.msra.mxu0 0.0
  %207 = vmatpush.msra.mxu0 0.0
  %208 = vmatpush.msra.mxu0 0.0
  %209 = vmatpush.msra.mxu0 0.0
  %210 = vmatpush.msra.mxu0 0.0
  %211 = vmatpush.msra.mxu0 0.0
  %212 = vmatpush.msra.mxu0 0.0
  %213 = vmatpush.msra.mxu0 0.0
  %214 = vmatpush.msra.mxu0 0.0
  %215 = vmatpush.msra.mxu0 0.0
  %216 = vmatpush.msra.mxu0 0.0
  %217 = vmatpush.msra.mxu0 %v200
  %218 = vmatmul.f32.gmra.mxu0 %v197
  %v219 = vpop.f32.mrf.mxu0
  %v220 = vadd.f32 %v194, %v219
  %221 = vdwg.mxu0
  %s222 = scalar_lea.vmem %s9, 64
  %v223 = vld [vmem:[%s222] sm:$0xff]
  %v224 = vld [vmem:[%s222 + $0x8] sm:$0xff]
  %v225 = vld [vmem:[%s222 + $0x10] sm:$0xff]
  %v226 = vld [vmem:[%s222 + $0x18] sm:$0xff]
  %227 = vmatpush.msra.mxu0 0.0
  %228 = vmatpush.msra.mxu0 0.0
  %229 = vmatpush.msra.mxu0 0.0
  %230 = vmatpush.msra.mxu0 0.0
  %231 = vmatpush.msra.mxu0 0.0
  %232 = vmatpush.msra.mxu0 0.0
  %233 = vmatpush.msra.mxu0 0.0
  %234 = vmatpush.msra.mxu0 0.0
  %235 = vmatpush.msra.mxu0 0.0
  %236 = vmatpush.msra.mxu0 0.0
  %237 = vmatpush.msra.mxu0 0.0
  %238 = vmatpush.msra.mxu0 0.0
  %239 = vmatpush.msra.mxu0 %v226
  %240 = vmatpush.msra.mxu0 %v225
  %241 = vmatpush.msra.mxu0 %v224
  %242 = vmatpush.msra.mxu0 %v223
  %243 = vmatmul.f32.gmra.mxu0 %v119
  %v244 = vpop.f32.mrf.mxu0
  %v245 = vadd.f32 0.0, %v244
  %246 = vdwg.mxu0
  %s247 = scalar_lea.vmem %s5, 8
  %v248 = vld [vmem:[%s247] sm:$0xf]
  %v250 = vsel %vm169, %v248, 0
  %v253 = vsel %vm49, %v245, 0
  %255 = vmatpush.msra.mxu0 0.0
  %256 = vmatpush.msra.mxu0 0.0
  %257 = vmatpush.msra.mxu0 0.0
  %258 = vmatpush.msra.mxu0 0.0
  %259 = vmatpush.msra.mxu0 0.0
  %260 = vmatpush.msra.mxu0 0.0
  %261 = vmatpush.msra.mxu0 0.0
  %262 = vmatpush.msra.mxu0 0.0
  %263 = vmatpush.msra.mxu0 0.0
  %264 = vmatpush.msra.mxu0 0.0
  %265 = vmatpush.msra.mxu0 0.0
  %266 = vmatpush.msra.mxu0 0.0
  %267 = vmatpush.msra.mxu0 0.0
  %268 = vmatpush.msra.mxu0 0.0
  %269 = vmatpush.msra.mxu0 0.0
  %270 = vmatpush.msra.mxu0 %v253
  %271 = vmatmul.f32.gmra.mxu0 %v250
  %v272 = vpop.f32.mrf.mxu0
  %v273 = vadd.f32 0.0, %v272
  %274 = vdwg.mxu0
  %v275 = vadd.f32 %v220, %v273
  %s276 = scalar_lea.vmem %s9, 96
  %v277 = vld [vmem:[%s276] sm:$0xff]
  %v278 = vld [vmem:[%s276 + $0x8] sm:$0xff]
  %v279 = vld [vmem:[%s276 + $0x10] sm:$0xff]
  %v280 = vld [vmem:[%s276 + $0x18] sm:$0xff]
  %281 = vmatpush.msra.mxu0 0.0
  %282 = vmatpush.msra.mxu0 0.0
  %283 = vmatpush.msra.mxu0 0.0
  %284 = vmatpush.msra.mxu0 0.0
  %285 = vmatpush.msra.mxu0 0.0
  %286 = vmatpush.msra.mxu0 0.0
  %287 = vmatpush.msra.mxu0 0.0
  %288 = vmatpush.msra.mxu0 0.0
  %289 = vmatpush.msra.mxu0 0.0
  %290 = vmatpush.msra.mxu0 0.0
  %291 = vmatpush.msra.mxu0 0.0
  %292 = vmatpush.msra.mxu0 0.0
  %293 = vmatpush.msra.mxu0 %v280
  %294 = vmatpush.msra.mxu0 %v279
  %295 = vmatpush.msra.mxu0 %v278
  %296 = vmatpush.msra.mxu0 %v277
  %297 = vmatmul.f32.gmra.mxu0 %v119
  %v298 = vpop.f32.mrf.mxu0
  %v299 = vadd.f32 0.0, %v298
  %300 = vdwg.mxu0
  %s301 = scalar_lea.vmem %s5, 12
  %v302 = vld [vmem:[%s301] sm:$0xf]
  %v304 = vsel %vm169, %v302, 0
  %v307 = vsel %vm49, %v299, 0
  %309 = vmatpush.msra.mxu0 0.0
  %310 = vmatpush.msra.mxu0 0.0
  %311 = vmatpush.msra.mxu0 0.0
  %312 = vmatpush.msra.mxu0 0.0
  %313 = vmatpush.msra.mxu0 0.0
  %314 = vmatpush.msra.mxu0 0.0
  %315 = vmatpush.msra.mxu0 0.0
  %316 = vmatpush.msra.mxu0 0.0
  %317 = vmatpush.msra.mxu0 0.0
  %318 = vmatpush.msra.mxu0 0.0
  %319 = vmatpush.msra.mxu0 0.0
  %320 = vmatpush.msra.mxu0 0.0
  %321 = vmatpush.msra.mxu0 0.0
  %322 = vmatpush.msra.mxu0 0.0
  %323 = vmatpush.msra.mxu0 0.0
  %324 = vmatpush.msra.mxu0 %v307
  %325 = vmatmul.f32.gmra.mxu0 %v304
  %v326 = vpop.f32.mrf.mxu0
  %v327 = vadd.f32 0.0, %v326
  %328 = vdwg.mxu0
  %v329 = vadd.f32 %v275, %v327
  %s330 = scalar_lea.vmem %s9, 128
  %v331 = vld [vmem:[%s330] sm:$0xff]
  %v332 = vld [vmem:[%s330 + $0x8] sm:$0xff]
  %v333 = vld [vmem:[%s330 + $0x10] sm:$0xff]
  %v334 = vld [vmem:[%s330 + $0x18] sm:$0xff]
  %335 = vmatpush.msra.mxu0 0.0
  %336 = vmatpush.msra.mxu0 0.0
  %337 = vmatpush.msra.mxu0 0.0
  %338 = vmatpush.msra.mxu0 0.0
  %339 = vmatpush.msra.mxu0 0.0
  %340 = vmatpush.msra.mxu0 0.0
  %341 = vmatpush.msra.mxu0 0.0
  %342 = vmatpush.msra.mxu0 0.0
  %343 = vmatpush.msra.mxu0 0.0
  %344 = vmatpush.msra.mxu0 0.0
  %345 = vmatpush.msra.mxu0 0.0
  %346 = vmatpush.msra.mxu0 0.0
  %347 = vmatpush.msra.mxu0 %v334
  %348 = vmatpush.msra.mxu0 %v333
  %349 = vmatpush.msra.mxu0 %v332
  %350 = vmatpush.msra.mxu0 %v331
  %351 = vmatmul.f32.gmra.mxu0 %v119
  %v352 = vpop.f32.mrf.mxu0
  %v353 = vadd.f32 0.0, %v352
  %354 = vdwg.mxu0
  %s355 = scalar_lea.vmem %s5, 16
  %v356 = vld [vmem:[%s355] sm:$0xf]
  %v358 = vsel %vm169, %v356, 0
  %v361 = vsel %vm49, %v353, 0
  %363 = vmatpush.msra.mxu0 0.0
  %364 = vmatpush.msra.mxu0 0.0
  %365 = vmatpush.msra.mxu0 0.0
  %366 = vmatpush.msra.mxu0 0.0
  %367 = vmatpush.msra.mxu0 0.0
  %368 = vmatpush.msra.mxu0 0.0
  %369 = vmatpush.msra.mxu0 0.0
  %370 = vmatpush.msra.mxu0 0.0
  %371 = vmatpush.msra.mxu0 0.0
  %372 = vmatpush.msra.mxu0 0.0
  %373 = vmatpush.msra.mxu0 0.0
  %374 = vmatpush.msra.mxu0 0.0
  %375 = vmatpush.msra.mxu0 0.0
  %376 = vmatpush.msra.mxu0 0.0
  %377 = vmatpush.msra.mxu0 0.0
  %378 = vmatpush.msra.mxu0 %v361
  %379 = vmatmul.f32.gmra.mxu0 %v358
  %v380 = vpop.f32.mrf.mxu0
  %v381 = vadd.f32 0.0, %v380
  %382 = vdwg.mxu0
  %v383 = vadd.f32 %v329, %v381
  %v384 = vld [vmem:[%s6] sm:$0xf]
  %386 = vset.pattern.permute.xlu0 0
  %387 = vperm.xlu0 %386, %v384
  %v388 = vpop.permute.xlu0 %387
  %v390 = vadd.f32 %v383, %v388
  %v391 = vsel %vm73, %v390, 0.0
  %392 = vadd.xlane.f32.xlu0 %v391
  %v393 = vpop.xlane.xlu0 %392
  %v394 = vmul.f32 %v393, 0.03125
  %v395 = vmul.f32 %v390, %v390
  %v396 = vsel %vm73, %v395, 0.0
  %397 = vadd.xlane.f32.xlu0 %v396
  %v398 = vpop.xlane.xlu0 %397
  %v399 = vmul.f32 %v398, 0.03125
  %v400 = vmul.f32 %v394, %v394
  %v401 = vsub.f32 %v399, %v400
  %v402 = vadd.f32 %v401, 1e-05
  %v403 = vrsqrt.pop %v402
  %v404 = vmul.f32 %v403, %v402
  %v405 = vmul.f32 %v404, %v403
  %v406 = vmul.f32 0.5, %v405
  %v407 = vsub.f32 1.5, %v406
  %v408 = vmul.f32 %v403, %v407
  %vm409 = vweird.f32 %v402
  %vm410 = vweird.f32 %v403
  %vm411 = vmor %vm409, %vm410
  %v412 = vsel %vm411, %v403, %v408
  %v413 = vld [vmem:[%s7] sm:$0xf]
  %v414 = vmul.f32 %v412, %v413
  %v415 = vsub.f32 %v390, %v394
  %417 = vset.pattern.permute.xlu0 0
  %418 = vperm.xlu0 %417, %v414
  %v419 = vpop.permute.xlu0 %418
  %v421 = vmul.f32 %v415, %v419
  %v422 = vld [vmem:[%s8] sm:$0xf]
  %424 = vset.pattern.permute.xlu0 0
  %425 = vperm.xlu0 %424, %v422
  %v426 = vpop.permute.xlu0 %425
  %v428 = vadd.f32 %v421, %v426
  %v429 = vld [vmem:[%s0 + $0x8] sm:$0xf]
  %v430 = vadd.f32 %v429, %v428
  %v431 = vmax.f32 %v430, 0.0
  %432 = vst.msk [vmem:[%s10] sm:$0xf] %vm73, %v431
  // Predicated region
  $region42: #{residual_block.1} parent=0 // pred_check
    _
  $region43: #{residual_block.1} parent=0 // pred_check_branch
    %434 = sbr.rel (0) target = $region45
  $region44: #{residual_block.1} parent=0 // pred_region
    _
  $region45: #{residual_block.1} parent=0 // pred_fallthru
    _
  // Predicated region
  $region46: #{residual_block.1} parent=0 // pred_check
    _
  $region47: #{residual_block.1} parent=0 // pred_check_branch
    %436 = sbr.rel (0) target = $region49
  $region48: #{residual_block.1} parent=0 // pred_region
    _
  $region49: #{residual_block.1} parent=0 // pred_fallthru
    _

</llo_original>
